<compile_context>
chip_gen: v7x
topology: tpu7x:2x2x1
jax: 0.10.0
libtpu: 0.0.40
codegen_flags: <defaults>
</compile_context>

<pallas_src>
import functools
import math

import jax
import jax.numpy as jnp
from jax.experimental import pallas as pl
from jax.experimental.pallas import tpu as pltpu


def _round_up(x, m):
    return ((x + m - 1) // m) * m


# ---------------------------------------------------------------------------
# Fused multi-layer kernel.
# Ref layout: x_ref, W0, b0, W1, b1, ..., W_{L-1}, b_{L-1}, alpha_ref, o_ref
# Grid = (M / tm,)  -- row tiles only; weights/biases are grid-invariant blocks.
# ---------------------------------------------------------------------------
def _homo_mlp_kernel(*refs, num_layers):
    x_ref = refs[0]
    wb_refs = refs[1:1 + 2 * num_layers]
    alpha_ref = refs[1 + 2 * num_layers]
    o_ref = refs[2 + 2 * num_layers]

    alpha = alpha_ref[0]                      # shared PReLU parameter (SMEM)
    h = x_ref[...]
    for li in range(num_layers):
        w_ref = wb_refs[2 * li]
        b_ref = wb_refs[2 * li + 1]
        y = jnp.dot(h, w_ref[...], preferred_element_type=jnp.float32)
        y = y + b_ref[...]                    # bias broadcast over rows
        if li < num_layers - 1:
            y = jnp.where(y > 0, y, alpha * y)   # PReLU
            # dropout: identity in eval mode
        h = y
    o_ref[...] = h.astype(o_ref.dtype)


# ---------------------------------------------------------------------------
# Parameter init (matches reset_parameters: xavier_uniform gain=sqrt(2), bias=0)
# Weights stored as (in, out); biases as (1, out); alpha as shape-(1,) f32.
# ---------------------------------------------------------------------------
def init_params(key, num_layers, feat_dim, hidden_dim, output_dim, prop_steps):
    in_dim = (prop_steps + 1) * feat_dim
    dims = [in_dim] + [hidden_dim] * (num_layers - 1) + [output_dim]
    gain = math.sqrt(2.0)  # nn.init.calculate_gain('relu')

    weights, biases = [], []
    for li in range(num_layers):
        fan_in, fan_out = dims[li], dims[li + 1]
        key, sub = jax.random.split(key)
        bound = gain * math.sqrt(6.0 / (fan_in + fan_out))
        w = jax.random.uniform(sub, (fan_in, fan_out), jnp.float32,
                               minval=-bound, maxval=bound)
        weights.append(w)
        biases.append(jnp.zeros((1, fan_out), jnp.float32))

    prelu_alpha = jnp.full((1,), 0.25, jnp.float32)  # nn.PReLU default
    return {"weights": weights, "biases": biases, "prelu_alpha": prelu_alpha}


# ---------------------------------------------------------------------------
# Forward pass (bn=False, ln=False module defaults; dropout = identity)
# ---------------------------------------------------------------------------
def homo_propagate_forward(params, smoothed_feature, global_logits, *,
                           row_tile=256):
    ws = params["weights"]
    bs = params["biases"]
    alpha = params["prelu_alpha"]
    num_layers = len(ws)

    x = smoothed_feature.astype(jnp.float32)
    M, K = x.shape
    assert K == ws[0].shape[0]
    n_out = ws[-1].shape[1]

    # Row tiling: rows are the only gridded axis.  Pad rows once (only if needed)
    # so the grid divides evenly; padded rows are sliced off at the end.
    tm = min(row_tile, _round_up(M, 8))
    mp = _round_up(M, tm)
    if mp != M:
        x = jnp.zeros((mp, K), x.dtype).at[:M].set(x)
    grid = (mp // tm,)

    # Build specs: x tiled over rows; every weight/bias is one full-extent,
    # grid-invariant block (resident in VMEM across all row tiles).
    in_specs = [pl.BlockSpec((tm, K), lambda i: (i, 0))]
    inputs = [x]
    hidden_max = 0
    for w, b in zip(ws, bs):
        k_in, k_out = w.shape
        hidden_max = max(hidden_max, k_out)
        in_specs.append(pl.BlockSpec((k_in, k_out), lambda i: (0, 0)))
        in_specs.append(pl.BlockSpec((1, k_out), lambda i: (0, 0)))
        inputs.append(w)
        inputs.append(b)
    in_specs.append(pl.BlockSpec(memory_space=pltpu.SMEM))  # PReLU alpha
    inputs.append(alpha)

    # Explicit VMEM budget (safe on v5e's 16 MiB scoped default and v7x's
    # 32 MiB scoped / 64 MiB physical): double-buffered x + out tiles, resident
    # params, and a couple of intermediate activation tiles, with headroom.
    vmem_need = 2 * tm * K * 4 + 2 * tm * n_out * 4
    vmem_need += sum(2 * (w.size + b.size) * 4 for w, b in zip(ws, bs))
    vmem_need += 2 * tm * max(hidden_max, 128) * 4
    vmem_limit = min(max(2 * vmem_need + (2 << 20), 8 << 20), 32 << 20)

    kernel = functools.partial(_homo_mlp_kernel, num_layers=num_layers)

    out = pl.pallas_call(
        kernel,
        out_shape=jax.ShapeDtypeStruct((mp, n_out), jnp.float32),
        grid_spec=pltpu.PrefetchScalarGridSpec(
            num_scalar_prefetch=0,
            grid=grid,
            in_specs=in_specs,
            out_specs=pl.BlockSpec((tm, n_out), lambda i: (i, 0)),
        ),
        compiler_params=pltpu.CompilerParams(
            dimension_semantics=("parallel",),
            vmem_limit_bytes=vmem_limit,
        ),
    )(*inputs)

    local_smooth_logits = out[:M] if mp != M else out
    return local_smooth_logits, global_logits


# ---------------------------------------------------------------------------
# Pure-JAX reference (same math) for a correctness check.
# ---------------------------------------------------------------------------
def _reference_forward(params, x, global_logits):
    ws, bs = params["weights"], params["biases"]
    alpha = params["prelu_alpha"][0]
    h = x
    for i in range(len(ws) - 1):
        h = h @ ws[i] + bs[i]
        h = jnp.where(h > 0, h, alpha * h)
    return h @ ws[-1] + bs[-1], global_logits


if __name__ == "__main__":
    # Small, module-consistent shapes.
    num_layers = 3
    feat_dim = 8
    prop_steps = 3
    hidden_dim = 32
    output_dim = 8
    num_nodes = 16

    key = jax.random.PRNGKey(0)
    key, k_feat, k_logits = jax.random.split(key, 3)

    smoothed_feature = jax.random.normal(
        k_feat, (num_nodes, (prop_steps + 1) * feat_dim), jnp.float32
    )
    global_logits = jax.random.normal(
        k_logits, (num_nodes, output_dim), jnp.float32
    )

    params = init_params(key, num_layers, feat_dim, hidden_dim,
                         output_dim, prop_steps)

    local_smooth_logits, global_out = homo_propagate_forward(
        params, smoothed_feature, global_logits
    )
    jax.block_until_ready((local_smooth_logits, global_out))

    assert local_smooth_logits.shape == (num_nodes, output_dim)
    assert global_out.shape == global_logits.shape

    ref_logits, ref_global = _reference_forward(
        params, smoothed_feature, global_logits
    )
    assert jnp.allclose(local_smooth_logits, ref_logits, rtol=5e-3, atol=5e-3)
    assert jnp.allclose(global_out, ref_global)

    print("KERNEL_OK")
</pallas_src>

<mosaic_0001>
module attributes {stable_mosaic.version = 11 : i64} {
  func.func @_homo_mlp_kernel(%arg0: i32, %arg1: memref<16x32xf32, #tpu.memory_space<vmem>>, %arg2: memref<32x32xf32, #tpu.memory_space<vmem>>, %arg3: memref<1x32xf32, #tpu.memory_space<vmem>>, %arg4: memref<32x32xf32, #tpu.memory_space<vmem>>, %arg5: memref<1x32xf32, #tpu.memory_space<vmem>>, %arg6: memref<32x8xf32, #tpu.memory_space<vmem>>, %arg7: memref<1x8xf32, #tpu.memory_space<vmem>>, %arg8: memref<1xf32, #tpu.memory_space<smem>>, %arg9: memref<16x8xf32, #tpu.memory_space<vmem>>) attributes {dimension_semantics = [#tpu.dimension_semantics<parallel>], iteration_bounds = array<i64: 1>, scalar_prefetch = 0 : i64, scratch_operands = 0 : i64, tpu.core_type = #tpu.core_type<tc>, window_params = [{transform_indices = @transform_0, window_bounds = array<i64: 16, 32>}, {pipeline_mode = #tpu.pipeline_mode<synchronous>, transform_indices = @transform_1, window_bounds = array<i64: 32, 32>}, {pipeline_mode = #tpu.pipeline_mode<synchronous>, transform_indices = @transform_2, window_bounds = array<i64: 1, 32>}, {pipeline_mode = #tpu.pipeline_mode<synchronous>, transform_indices = @transform_3, window_bounds = array<i64: 32, 32>}, {pipeline_mode = #tpu.pipeline_mode<synchronous>, transform_indices = @transform_4, window_bounds = array<i64: 1, 32>}, {pipeline_mode = #tpu.pipeline_mode<synchronous>, transform_indices = @transform_5, window_bounds = array<i64: 32, 8>}, {pipeline_mode = #tpu.pipeline_mode<synchronous>, transform_indices = @transform_6, window_bounds = array<i64: 1, 8>}, {transform_indices = @transform_7, window_bounds = array<i64: 1>}, {transform_indices = @transform_8, window_bounds = array<i64: 16, 8>}]} {
    %c0 = arith.constant 0 : index
    %0 = memref.load %arg8[%c0] : memref<1xf32, #tpu.memory_space<smem>>
    %c0_0 = arith.constant 0 : index
    %c0_1 = arith.constant 0 : index
    %1 = vector.load %arg1[%c0_0, %c0_1] : memref<16x32xf32, #tpu.memory_space<vmem>>, vector<16x32xf32>
    %c0_2 = arith.constant 0 : index
    %c0_3 = arith.constant 0 : index
    %2 = vector.load %arg2[%c0_2, %c0_3] : memref<32x32xf32, #tpu.memory_space<vmem>>, vector<32x32xf32>
    %cst = arith.constant dense<0.000000e+00> : vector<16x32xf32>
    %3 = tpu.matmul %1, %2, %cst {dimension_numbers = #tpu.dot_dimension_numbers<[1], [0], [0], [1], [0, 0, 1, 1], [], []>} : vector<16x32xf32>, vector<32x32xf32>, vector<16x32xf32> -> vector<16x32xf32>
    %c0_4 = arith.constant 0 : index
    %c0_5 = arith.constant 0 : index
    %4 = vector.load %arg3[%c0_4, %c0_5] : memref<1x32xf32, #tpu.memory_space<vmem>>, vector<1x32xf32>
    %5 = vector.broadcast %4 : vector<1x32xf32> to vector<16x32xf32>
    %6 = arith.addf %3, %5 : vector<16x32xf32>
    %cst_6 = arith.constant 0.000000e+00 : f32
    %7 = vector.broadcast %cst_6 : f32 to vector<16x32xf32>
    %8 = arith.cmpf ogt, %6, %7 : vector<16x32xf32>
    %9 = vector.broadcast %0 : f32 to vector<16x32xf32>
    %10 = arith.mulf %9, %6 : vector<16x32xf32>
    %11 = arith.select %8, %6, %10 : vector<16x32xi1>, vector<16x32xf32>
    %c0_7 = arith.constant 0 : index
    %c0_8 = arith.constant 0 : index
    %12 = vector.load %arg4[%c0_7, %c0_8] : memref<32x32xf32, #tpu.memory_space<vmem>>, vector<32x32xf32>
    %cst_9 = arith.constant dense<0.000000e+00> : vector<16x32xf32>
    %13 = tpu.matmul %11, %12, %cst_9 {dimension_numbers = #tpu.dot_dimension_numbers<[1], [0], [0], [1], [0, 0, 1, 1], [], []>} : vector<16x32xf32>, vector<32x32xf32>, vector<16x32xf32> -> vector<16x32xf32>
    %c0_10 = arith.constant 0 : index
    %c0_11 = arith.constant 0 : index
    %14 = vector.load %arg5[%c0_10, %c0_11] : memref<1x32xf32, #tpu.memory_space<vmem>>, vector<1x32xf32>
    %15 = vector.broadcast %14 : vector<1x32xf32> to vector<16x32xf32>
    %16 = arith.addf %13, %15 : vector<16x32xf32>
    %cst_12 = arith.constant 0.000000e+00 : f32
    %17 = vector.broadcast %cst_12 : f32 to vector<16x32xf32>
    %18 = arith.cmpf ogt, %16, %17 : vector<16x32xf32>
    %19 = vector.broadcast %0 : f32 to vector<16x32xf32>
    %20 = arith.mulf %19, %16 : vector<16x32xf32>
    %21 = arith.select %18, %16, %20 : vector<16x32xi1>, vector<16x32xf32>
    %c0_13 = arith.constant 0 : index
    %c0_14 = arith.constant 0 : index
    %22 = vector.load %arg6[%c0_13, %c0_14] : memref<32x8xf32, #tpu.memory_space<vmem>>, vector<32x8xf32>
    %cst_15 = arith.constant dense<0.000000e+00> : vector<16x8xf32>
    %23 = tpu.matmul %21, %22, %cst_15 {dimension_numbers = #tpu.dot_dimension_numbers<[1], [0], [0], [1], [0, 0, 1, 1], [], []>} : vector<16x32xf32>, vector<32x8xf32>, vector<16x8xf32> -> vector<16x8xf32>
    %c0_16 = arith.constant 0 : index
    %c0_17 = arith.constant 0 : index
    %24 = vector.load %arg7[%c0_16, %c0_17] : memref<1x8xf32, #tpu.memory_space<vmem>>, vector<1x8xf32>
    %25 = vector.broadcast %24 : vector<1x8xf32> to vector<16x8xf32>
    %26 = arith.addf %23, %25 : vector<16x8xf32>
    %c0_18 = arith.constant 0 : index
    %c0_19 = arith.constant 0 : index
    %27 = vector.load %arg9[%c0_18, %c0_19] : memref<16x8xf32, #tpu.memory_space<vmem>>, vector<16x8xf32>
    tpu.vector_store %arg9[%c0_18, %c0_19], %26 {strides = array<i32>} : memref<16x8xf32, #tpu.memory_space<vmem>>, vector<16x8xf32>,
    return
  }
  func.func @transform_0(%arg0: i32) -> (i32, i32) {
    %c0_i32 = arith.constant 0 : i32
    %c0_i32_0 = arith.constant 0 : i32
    return %arg0, %c0_i32 : i32, i32
  }
  func.func @transform_1(%arg0: i32) -> (i32, i32) {
    %c0_i32 = arith.constant 0 : i32
    %c0_i32_0 = arith.constant 0 : i32
    %c0_i32_1 = arith.constant 0 : i32
    return %c0_i32, %c0_i32_0 : i32, i32
  }
  func.func @transform_2(%arg0: i32) -> (i32, i32) {
    %c0_i32 = arith.constant 0 : i32
    %c0_i32_0 = arith.constant 0 : i32
    %c0_i32_1 = arith.constant 0 : i32
    return %c0_i32, %c0_i32_0 : i32, i32
  }
  func.func @transform_3(%arg0: i32) -> (i32, i32) {
    %c0_i32 = arith.constant 0 : i32
    %c0_i32_0 = arith.constant 0 : i32
    %c0_i32_1 = arith.constant 0 : i32
    return %c0_i32, %c0_i32_0 : i32, i32
  }
  func.func @transform_4(%arg0: i32) -> (i32, i32) {
    %c0_i32 = arith.constant 0 : i32
    %c0_i32_0 = arith.constant 0 : i32
    %c0_i32_1 = arith.constant 0 : i32
    return %c0_i32, %c0_i32_0 : i32, i32
  }
  func.func @transform_5(%arg0: i32) -> (i32, i32) {
    %c0_i32 = arith.constant 0 : i32
    %c0_i32_0 = arith.constant 0 : i32
    %c0_i32_1 = arith.constant 0 : i32
    return %c0_i32, %c0_i32_0 : i32, i32
  }
  func.func @transform_6(%arg0: i32) -> (i32, i32) {
    %c0_i32 = arith.constant 0 : i32
    %c0_i32_0 = arith.constant 0 : i32
    %c0_i32_1 = arith.constant 0 : i32
    return %c0_i32, %c0_i32_0 : i32, i32
  }
  func.func @transform_7(%arg0: i32) -> i32 {
    %c0_i32 = arith.constant 0 : i32
    %c0_i32_0 = arith.constant 0 : i32
    return %c0_i32 : i32
  }
  func.func @transform_8(%arg0: i32) -> (i32, i32) {
    %c0_i32 = arith.constant 0 : i32
    %c0_i32_0 = arith.constant 0 : i32
    return %arg0, %c0_i32 : i32, i32
  }
}

</mosaic_0001>

<llo_original>
// kernel: tpu_custom_call.1
$region0: #{tpu_custom_call.1}
  #allocation0 [shape = 'u32[]', space=smem, size = 0x4, offset = 0x4, fixed_abs, tag = 'smem constant byte address 0x4 - core index']
  #allocation1 [shape = 'u32[144,128]{1,0:T(1,128)}', space=vmem, size = 0x12000, scoped, tag = 'internal scratch']
  #allocation2 [shape = 'f32[1]{0:T(128)S(6)}', space=smem, size = 0x200, scoped, tag = 'scoped memory for tpu_custom_call.1']
  %s0 = inlined_call_operand.hbm [shape: f32[16,32], index: 0, kind: input, shape index: {}]
  %s1 = inlined_call_operand.vmem [shape: f32[32,32], index: 1, kind: input, shape index: {}]
  %s2 = inlined_call_operand.vmem [shape: f32[1,32], index: 2, kind: input, shape index: {}]
  %s3 = inlined_call_operand.hbm [shape: f32[32,32], index: 3, kind: input, shape index: {}]
  %s4 = inlined_call_operand.vmem [shape: f32[1,32], index: 4, kind: input, shape index: {}]
  %s5 = inlined_call_operand.vmem [shape: f32[32,8], index: 5, kind: input, shape index: {}]
  %s6 = inlined_call_operand.vmem [shape: f32[1,8], index: 6, kind: input, shape index: {}]
  %s7 = inlined_call_operand.<no memory space> [shape: f32[1], index: 7, kind: input, shape index: {}]
  %s8 = inlined_call_operand.vmem [shape: f32[16,8], index: 8, kind: output, shape index: {}]
  %s9 = sld [smem:[#allocation0]]
  $region50: #{tpu_custom_call.1} parent=0
    _
  %s11 = ssub.s32 1, %s9
  %s12 = scalar_select 0, %s11, %s9
  %13 = sst [smem:[#allocation2]] %s7
  $region1: #{tpu_custom_call.1} parent=0
    #allocation3 [shape = 'u8[8192]{0}', space=vmem, size = 0x2000, scoped, tag = 'input window, operand 0, single buffered']
    #allocation4 [shape = 's32[1]{0}', space=sflag, size = 0x4, scoped, tag = 'scoped memory for tpu_custom_call.1']
    #allocation5 [shape = 'u8[16384]{0}', space=vmem, size = 0x4000, scoped, tag = 'input window, operand 3, single buffered']
    #allocation6 [shape = 's32[1]{0}', space=sflag, size = 0x4, scoped, tag = 'scoped memory for tpu_custom_call.1']
    %14 = vsyncpa [#allocation4], 0
    %15 = vsyncpa [#allocation6], 0
    // Predicated region
    $region2: #{tpu_custom_call.1} parent=1 // pred_check
      _
    $region3: #{tpu_custom_call.1} parent=1 // pred_check_branch
      %17 = sbr.rel (0) target = $region5
    $region4: #{tpu_custom_call.1} parent=1 // pred_region
      %s19 = ssub.s32 256, 256
      %20 = vsyncadd [#allocation4], %s19
      %s21 = sshll.u32 [#allocation3], 4
      %s22 = int_to_ptr.vmem [resolvable:$true] %s21
      %27 = dma.hbm_to_vmem [thread:$0]  %s0, 256, %s22, [#allocation4], 128, 128, 8
    $region5: #{tpu_custom_call.1} parent=1 // pred_fallthru
      _
    // Predicated region
    $region6: #{tpu_custom_call.1} parent=1 // pred_check
      _
    $region7: #{tpu_custom_call.1} parent=1 // pred_check_branch
      %29 = sbr.rel (0) target = $region9
    $region8: #{tpu_custom_call.1} parent=1 // pred_region
      _
    $region9: #{tpu_custom_call.1} parent=1 // pred_fallthru
      _
    // Predicated region
    $region10: #{tpu_custom_call.1} parent=1 // pred_check
      _
    $region11: #{tpu_custom_call.1} parent=1 // pred_check_branch
      %31 = sbr.rel (0) target = $region13
    $region12: #{tpu_custom_call.1} parent=1 // pred_region
      _
    $region13: #{tpu_custom_call.1} parent=1 // pred_fallthru
      _
    // Predicated region
    $region14: #{tpu_custom_call.1} parent=1 // pred_check
      _
    $region15: #{tpu_custom_call.1} parent=1 // pred_check_branch
      %33 = sbr.rel (0) target = $region17
    $region16: #{tpu_custom_call.1} parent=1 // pred_region
      %s35 = ssub.s32 512, 512
      %36 = vsyncadd [#allocation6], %s35
      %s37 = sshll.u32 [#allocation5], 4
      %s38 = int_to_ptr.vmem [resolvable:$true] %s37
      %43 = dma.hbm_to_vmem [thread:$0]  %s3, 512, %s38, [#allocation6], 128, 128, 8
    $region17: #{tpu_custom_call.1} parent=1 // pred_fallthru
      _
    // Predicated region
    $region18: #{tpu_custom_call.1} parent=1 // pred_check
      _
    $region19: #{tpu_custom_call.1} parent=1 // pred_check_branch
      %45 = sbr.rel (0) target = $region21
    $region20: #{tpu_custom_call.1} parent=1 // pred_region
      _
    $region21: #{tpu_custom_call.1} parent=1 // pred_fallthru
      _
    // Predicated region
    $region22: #{tpu_custom_call.1} parent=1 // pred_check
      _
    $region23: #{tpu_custom_call.1} parent=1 // pred_check_branch
      %47 = sbr.rel (0) target = $region25
    $region24: #{tpu_custom_call.1} parent=1 // pred_region
      _
    $region25: #{tpu_custom_call.1} parent=1 // pred_fallthru
      _
    // Predicated region
    $region26: #{tpu_custom_call.1} parent=1 // pred_check
      _
    $region27: #{tpu_custom_call.1} parent=1 // pred_check_branch
      %49 = sbr.rel (0) target = $region29
    $region28: #{tpu_custom_call.1} parent=1 // pred_region
      _
    $region29: #{tpu_custom_call.1} parent=1 // pred_fallthru
      _
    // Predicated region
    $region30: #{tpu_custom_call.1} parent=1 // pred_check
      _
    $region31: #{tpu_custom_call.1} parent=1 // pred_check_branch
      %51 = sbr.rel (0) target = $region33
    $region32: #{tpu_custom_call.1} parent=1 // pred_region
      _
    $region33: #{tpu_custom_call.1} parent=1 // pred_fallthru
      _
    // Predicated region
    $region34: #{tpu_custom_call.1} parent=1 // pred_check
      _
    $region35: #{tpu_custom_call.1} parent=1 // pred_check_branch
      %53 = sbr.rel (0) target = $region37
    $region36: #{tpu_custom_call.1} parent=1 // pred_region
      %54 = dma.done [#allocation4], 256
    $region37: #{tpu_custom_call.1} parent=1 // pred_fallthru
      _
    // Predicated region
    $region38: #{tpu_custom_call.1} parent=1 // pred_check
      _
    $region39: #{tpu_custom_call.1} parent=1 // pred_check_branch
      %56 = sbr.rel (0) target = $region41
    $region40: #{tpu_custom_call.1} parent=1 // pred_region
      %57 = dma.done [#allocation6], 512
    $region41: #{tpu_custom_call.1} parent=1 // pred_fallthru
      _
    %s58 = sld [smem:[#allocation2]]
    %v59 = vld [vmem:[#allocation3] sm:$0xff]
    %v60 = vld [vmem:[#allocation3 + $0x8] sm:$0xff]
    %v61 = vld [vmem:[%s1] sm:$0xff]
    %v62 = vld [vmem:[%s1 + $0x8] sm:$0xff]
    %v63 = vld [vmem:[%s1 + $0x10] sm:$0xff]
    %v64 = vld [vmem:[%s1 + $0x18] sm:$0xff]
    %v65 = vld [vmem:[%s2] sm:$0x1]
    %v67 = vlaneseq
    %v68 = vshrl.u32 %v67, 7
    %v69 = vsub.s32 0, %v68
    %v70 = vrot.slane %v65, %v69
    %vm72 = vcmask 261120
    %v74 = vsel %vm72, %v59, 0
    %v77 = vsel %vm72, %v60, 0
    %79 = vmatprep.subr.mxu0 0.0
    %80 = vmatpush1.msra.mxu0 %v61
    %81 = vmatprep.subr.mxu0 0.0
    %82 = vmatpush1.msra.mxu0 %v62
    %83 = vmatprep.subr.mxu0 0.0
    %84 = vmatpush1.msra.mxu0 %v63
    %85 = vmatprep.subr.mxu0 0.0
    %86 = vmatpush1.msra.mxu0 %v64
    %87 = vmatprep.subr.mxu0 0.0
    %88 = vmatpush1.msra.mxu0 0.0
    %89 = vmatprep.subr.mxu0 0.0
    %90 = vmatpush1.msra.mxu0 0.0
    %91 = vmatprep.subr.mxu0 0.0
    %92 = vmatpush1.msra.mxu0 0.0
    %93 = vmatprep.subr.mxu0 0.0
    %94 = vmatpush1.msra.mxu0 0.0
    %95 = vmatprep.subr.mxu0 0.0
    %96 = vmatpush1.msra.mxu0 0.0
    %97 = vmatprep.subr.mxu0 0.0
    %98 = vmatpush1.msra.mxu0 0.0
    %99 = vmatprep.subr.mxu0 0.0
    %100 = vmatpush1.msra.mxu0 0.0
    %101 = vmatprep.subr.mxu0 0.0
    %102 = vmatpush1.msra.mxu0 0.0
    %103 = vmatprep.subr.mxu0 0.0
    %104 = vmatpush1.msra.mxu0 0.0
    %105 = vmatprep.subr.mxu0 0.0
    %106 = vmatpush1.msra.mxu0 0.0
    %107 = vmatprep.subr.mxu0 0.0
    %108 = vmatpush1.msra.mxu0 0.0
    %109 = vmatprep.subr.mxu0 0.0
    %110 = vmatpush1.msra.mxu0 0.0
    %111 = vmatprep.subr.mxu0 0.0
    %112 = vmatpush1.msra.mxu0 0.0
    %113 = vmatprep.subr.mxu0 0.0
    %114 = vmatpush1.msra.mxu0 0.0
    %115 = vmatprep.subr.mxu0 0.0
    %116 = vmatpush1.msra.mxu0 0.0
    %117 = vmatprep.subr.mxu0 0.0
    %118 = vmatpush1.msra.mxu0 0.0
    %119 = vmatprep.subr.mxu0 0.0
    %120 = vmatpush1.msra.mxu0 0.0
    %121 = vmatprep.subr.mxu0 0.0
    %122 = vmatpush1.msra.mxu0 0.0
    %123 = vmatprep.subr.mxu0 0.0
    %124 = vmatpush1.msra.mxu0 0.0
    %125 = vmatprep.subr.mxu0 0.0
    %126 = vmatpush1.msra.mxu0 0.0
    %127 = vmatprep.subr.mxu0 0.0
    %128 = vmatpush1.msra.mxu0 0.0
    %129 = vmatprep.subr.mxu0 0.0
    %130 = vmatpush1.msra.mxu0 0.0
    %131 = vmatprep.subr.mxu0 0.0
    %132 = vmatpush1.msra.mxu0 0.0
    %133 = vmatprep.subr.mxu0 0.0
    %134 = vmatpush1.msra.mxu0 0.0
    %135 = vmatprep.subr.mxu0 0.0
    %136 = vmatpush1.msra.mxu0 0.0
    %137 = vmatprep.subr.mxu0 0.0
    %138 = vmatpush1.msra.mxu0 0.0
    %139 = vmatprep.subr.mxu0 0.0
    %140 = vmatpush1.msra.mxu0 0.0
    %141 = vmatprep.subr.mxu0 0.0
    %142 = vmatpush1.msra.mxu0 0.0
    %143 = vmatprep.mubr.f32.mxu0 0.0
    %144 = vmatmul.mubr.f32.gmra.mrb[0].mxu0 %v74
    %v145 = vpop.f32.mrb[0].mxu0
    %v146 = vadd.f32 %v70, %v145
    %v147 = vpop.f32.mrb[0].mxu0
    %148 = vmatprep.mubr.f32.mxu0 0.0
    %149 = vmatmul.mubr.f32.gmra.mrb[0].mxu0 %v77
    %v150 = vpop.f32.mrb[0].mxu0
    %v151 = vadd.f32 %v70, %v150
    %v152 = vpop.f32.mrb[0].mxu0
    %153 = vdwg.mxu0
    %vm154 = vcmp.gt.f32.partialorder %v146, 0.0
    %vm155 = vcmp.gt.f32.partialorder %v151, 0.0
    %v156 = vstv %s58
    %v157 = vmul.f32 %v156, %v146
    %v158 = vmul.f32 %v156, %v151
    %v159 = vsel %vm154, %v146, %v157
    %v160 = vsel %vm155, %v151, %v158
    %v161 = vld [vmem:[#allocation5] sm:$0xff]
    %v162 = vld [vmem:[#allocation5 + $0x8] sm:$0xff]
    %v163 = vld [vmem:[#allocation5 + $0x10] sm:$0xff]
    %v164 = vld [vmem:[#allocation5 + $0x18] sm:$0xff]
    %v165 = vld [vmem:[%s4] sm:$0x1]
    %v167 = vlaneseq
    %v168 = vshrl.u32 %v167, 7
    %v169 = vsub.s32 0, %v168
    %v170 = vrot.slane %v165, %v169
    %v173 = vsel %vm72, %v159, 0
    %v176 = vsel %vm72, %v160, 0
    %178 = vmatprep.subr.mxu0 0.0
    %179 = vmatpush1.msra.mxu0 %v161
    %180 = vmatprep.subr.mxu0 0.0
    %181 = vmatpush1.msra.mxu0 %v162
    %182 = vmatprep.subr.mxu0 0.0
    %183 = vmatpush1.msra.mxu0 %v163
    %184 = vmatprep.subr.mxu0 0.0
    %185 = vmatpush1.msra.mxu0 %v164
    %186 = vmatprep.subr.mxu0 0.0
    %187 = vmatpush1.msra.mxu0 0.0
    %188 = vmatprep.subr.mxu0 0.0
    %189 = vmatpush1.msra.mxu0 0.0
    %190 = vmatprep.subr.mxu0 0.0
    %191 = vmatpush1.msra.mxu0 0.0
    %192 = vmatprep.subr.mxu0 0.0
    %193 = vmatpush1.msra.mxu0 0.0
    %194 = vmatprep.subr.mxu0 0.0
    %195 = vmatpush1.msra.mxu0 0.0
    %196 = vmatprep.subr.mxu0 0.0
    %197 = vmatpush1.msra.mxu0 0.0
    %198 = vmatprep.subr.mxu0 0.0
    %199 = vmatpush1.msra.mxu0 0.0
    %200 = vmatprep.subr.mxu0 0.0
    %201 = vmatpush1.msra.mxu0 0.0
    %202 = vmatprep.subr.mxu0 0.0
    %203 = vmatpush1.msra.mxu0 0.0
    %204 = vmatprep.subr.mxu0 0.0
    %205 = vmatpush1.msra.mxu0 0.0
    %206 = vmatprep.subr.mxu0 0.0
    %207 = vmatpush1.msra.mxu0 0.0
    %208 = vmatprep.subr.mxu0 0.0
    %209 = vmatpush1.msra.mxu0 0.0
    %210 = vmatprep.subr.mxu0 0.0
    %211 = vmatpush1.msra.mxu0 0.0
    %212 = vmatprep.subr.mxu0 0.0
    %213 = vmatpush1.msra.mxu0 0.0
    %214 = vmatprep.subr.mxu0 0.0
    %215 = vmatpush1.msra.mxu0 0.0
    %216 = vmatprep.subr.mxu0 0.0
    %217 = vmatpush1.msra.mxu0 0.0
    %218 = vmatprep.subr.mxu0 0.0
    %219 = vmatpush1.msra.mxu0 0.0
    %220 = vmatprep.subr.mxu0 0.0
    %221 = vmatpush1.msra.mxu0 0.0
    %222 = vmatprep.subr.mxu0 0.0
    %223 = vmatpush1.msra.mxu0 0.0
    %224 = vmatprep.subr.mxu0 0.0
    %225 = vmatpush1.msra.mxu0 0.0
    %226 = vmatprep.subr.mxu0 0.0
    %227 = vmatpush1.msra.mxu0 0.0
    %228 = vmatprep.subr.mxu0 0.0
    %229 = vmatpush1.msra.mxu0 0.0
    %230 = vmatprep.subr.mxu0 0.0
    %231 = vmatpush1.msra.mxu0 0.0
    %232 = vmatprep.subr.mxu0 0.0
    %233 = vmatpush1.msra.mxu0 0.0
    %234 = vmatprep.subr.mxu0 0.0
    %235 = vmatpush1.msra.mxu0 0.0
    %236 = vmatprep.subr.mxu0 0.0
    %237 = vmatpush1.msra.mxu0 0.0
    %238 = vmatprep.subr.mxu0 0.0
    %239 = vmatpush1.msra.mxu0 0.0
    %240 = vmatprep.subr.mxu0 0.0
    %241 = vmatpush1.msra.mxu0 0.0
    %242 = vmatprep.mubr.f32.mxu0 0.0
    %243 = vmatmul.mubr.f32.gmra.mrb[0].mxu0 %v173
    %v244 = vpop.f32.mrb[0].mxu0
    %v245 = vadd.f32 %v170, %v244
    %v246 = vpop.f32.mrb[0].mxu0
    %247 = vmatprep.mubr.f32.mxu0 0.0
    %248 = vmatmul.mubr.f32.gmra.mrb[0].mxu0 %v176
    %v249 = vpop.f32.mrb[0].mxu0
    %v250 = vadd.f32 %v170, %v249
    %v251 = vpop.f32.mrb[0].mxu0
    %252 = vdwg.mxu0
    %vm253 = vcmp.gt.f32.partialorder %v245, 0.0
    %vm254 = vcmp.gt.f32.partialorder %v250, 0.0
    %v255 = vmul.f32 %v156, %v245
    %v256 = vmul.f32 %v156, %v250
    %v257 = vsel %vm253, %v245, %v255
    %v258 = vsel %vm254, %v250, %v256
    %v259 = vld [vmem:[%s5] sm:$0xff]
    %v260 = vld [vmem:[%s5 + $0x8] sm:$0xff]
    %v261 = vld [vmem:[%s5 + $0x10] sm:$0xff]
    %v262 = vld [vmem:[%s5 + $0x18] sm:$0xff]
    %v263 = vld [vmem:[%s6] sm:$0x1]
    %v265 = vlaneseq
    %v266 = vshrl.u32 %v265, 7
    %v267 = vsub.s32 0, %v266
    %v268 = vrot.slane %v263, %v267
    %v271 = vsel %vm72, %v257, 0
    %v274 = vsel %vm72, %v258, 0
    %276 = vmatprep.subr.mxu0 0.0
    %277 = vmatpush1.msra.mxu0 %v259
    %278 = vmatprep.subr.mxu0 0.0
    %279 = vmatpush1.msra.mxu0 %v260
    %280 = vmatprep.subr.mxu0 0.0
    %281 = vmatpush1.msra.mxu0 %v261
    %282 = vmatprep.subr.mxu0 0.0
    %283 = vmatpush1.msra.mxu0 %v262
    %284 = vmatprep.subr.mxu0 0.0
    %285 = vmatpush1.msra.mxu0 0.0
    %286 = vmatprep.subr.mxu0 0.0
    %287 = vmatpush1.msra.mxu0 0.0
    %288 = vmatprep.subr.mxu0 0.0
    %289 = vmatpush1.msra.mxu0 0.0
    %290 = vmatprep.subr.mxu0 0.0
    %291 = vmatpush1.msra.mxu0 0.0
    %292 = vmatprep.subr.mxu0 0.0
    %293 = vmatpush1.msra.mxu0 0.0
    %294 = vmatprep.subr.mxu0 0.0
    %295 = vmatpush1.msra.mxu0 0.0
    %296 = vmatprep.subr.mxu0 0.0
    %297 = vmatpush1.msra.mxu0 0.0
    %298 = vmatprep.subr.mxu0 0.0
    %299 = vmatpush1.msra.mxu0 0.0
    %300 = vmatprep.subr.mxu0 0.0
    %301 = vmatpush1.msra.mxu0 0.0
    %302 = vmatprep.subr.mxu0 0.0
    %303 = vmatpush1.msra.mxu0 0.0
    %304 = vmatprep.subr.mxu0 0.0
    %305 = vmatpush1.msra.mxu0 0.0
    %306 = vmatprep.subr.mxu0 0.0
    %307 = vmatpush1.msra.mxu0 0.0
    %308 = vmatprep.subr.mxu0 0.0
    %309 = vmatpush1.msra.mxu0 0.0
    %310 = vmatprep.subr.mxu0 0.0
    %311 = vmatpush1.msra.mxu0 0.0
    %312 = vmatprep.subr.mxu0 0.0
    %313 = vmatpush1.msra.mxu0 0.0
    %314 = vmatprep.subr.mxu0 0.0
    %315 = vmatpush1.msra.mxu0 0.0
    %316 = vmatprep.subr.mxu0 0.0
    %317 = vmatpush1.msra.mxu0 0.0
    %318 = vmatprep.subr.mxu0 0.0
    %319 = vmatpush1.msra.mxu0 0.0
    %320 = vmatprep.subr.mxu0 0.0
    %321 = vmatpush1.msra.mxu0 0.0
    %322 = vmatprep.subr.mxu0 0.0
    %323 = vmatpush1.msra.mxu0 0.0
    %324 = vmatprep.subr.mxu0 0.0
    %325 = vmatpush1.msra.mxu0 0.0
    %326 = vmatprep.subr.mxu0 0.0
    %327 = vmatpush1.msra.mxu0 0.0
    %328 = vmatprep.subr.mxu0 0.0
    %329 = vmatpush1.msra.mxu0 0.0
    %330 = vmatprep.subr.mxu0 0.0
    %331 = vmatpush1.msra.mxu0 0.0
    %332 = vmatprep.subr.mxu0 0.0
    %333 = vmatpush1.msra.mxu0 0.0
    %334 = vmatprep.subr.mxu0 0.0
    %335 = vmatpush1.msra.mxu0 0.0
    %336 = vmatprep.subr.mxu0 0.0
    %337 = vmatpush1.msra.mxu0 0.0
    %338 = vmatprep.subr.mxu0 0.0
    %339 = vmatpush1.msra.mxu0 0.0
    %340 = vmatprep.mubr.f32.mxu0 0.0
    %341 = vmatmul.mubr.f32.gmra.mrb[0].mxu0 %v271
    %v342 = vpop.f32.mrb[0].mxu0
    %v343 = vadd.f32 %v268, %v342
    %v344 = vpop.f32.mrb[0].mxu0
    %345 = vmatprep.mubr.f32.mxu0 0.0
    %346 = vmatmul.mubr.f32.gmra.mrb[0].mxu0 %v274
    %v347 = vpop.f32.mrb[0].mxu0
    %v348 = vadd.f32 %v268, %v347
    %v349 = vpop.f32.mrb[0].mxu0
    %350 = vdwg.mxu0
    %vm351 = vcmask 64512
    %352 = vst.msk [vmem:[%s8] sm:$0xff] %vm351, %v343
    %353 = vst.msk [vmem:[%s8 + $0x8] sm:$0xff] %vm351, %v348
    // Predicated region
    $region42: #{tpu_custom_call.1} parent=1 // pred_check
      _
    $region43: #{tpu_custom_call.1} parent=1 // pred_check_branch
      %355 = sbr.rel (0) target = $region45
    $region44: #{tpu_custom_call.1} parent=1 // pred_region
      _
    $region45: #{tpu_custom_call.1} parent=1 // pred_fallthru
      _
    // Predicated region
    $region46: #{tpu_custom_call.1} parent=1 // pred_check
      _
    $region47: #{tpu_custom_call.1} parent=1 // pred_check_branch
      %357 = sbr.rel (0) target = $region49
    $region48: #{tpu_custom_call.1} parent=1 // pred_region
      _
    $region49: #{tpu_custom_call.1} parent=1 // pred_fallthru
      _
    %358 = vsyncpa [#allocation4], 1
    %359 = vsyncpa [#allocation6], 1

</llo_original>
